<compile_context>
chip_gen: v7x
topology: tpu7x:2x2x1
jax: 0.10.0
libtpu: 0.0.40
codegen_flags: <defaults>
</compile_context>

<pallas_src>
import functools

import jax
import jax.numpy as jnp
from jax.experimental import pallas as pl
from jax.experimental.pallas import tpu as pltpu

_EPS = 1e-6  # matches torch.nn.functional.pairwise_distance default eps


def _contrastive_loss_kernel(x1_ref, x2_ref, lbl_ref, out_ref, *,
                             margin, batch, tile_b, mask_last):
    i = pl.program_id(0)

    @pl.when(i == 0)
    def _():
        out_ref[...] = jnp.zeros_like(out_ref)

    # Cast to f32 in VMEM (free on the VPU); HBM traffic stays at input width.
    x1 = x1_ref[...].astype(jnp.float32)              # (TB, D)
    x2 = x2_ref[...].astype(jnp.float32)              # (TB, D)
    lbl = lbl_ref[...].astype(jnp.float32)            # (TB, 1)

    diff = x1 - x2 + _EPS
    sq_dist = jnp.sum(diff * diff, axis=-1, keepdims=True)   # (TB, 1)
    dist = jnp.sqrt(sq_dist)                                  # EUP slot
    hinge = jnp.maximum(margin - dist, 0.0)
    per_sample = (1.0 - lbl) * (hinge * hinge) + lbl * sq_dist  # (TB, 1)

    if mask_last:
        # Zero out padded rows of the ragged last tile.
        row = i * tile_b + jax.lax.broadcasted_iota(jnp.int32, (tile_b, 1), 0)
        per_sample = jnp.where(row < batch, per_sample, 0.0)

    out_ref[...] += jnp.sum(per_sample, keepdims=True)        # (1, 1) accumulator

    @pl.when(i == pl.num_programs(0) - 1)
    def _():
        out_ref[...] = out_ref[...] * (1.0 / batch)


def contrastive_loss(output1, output2, label, margin: float = 0.5,
                     tile_b: int | None = None,
                     vmem_budget_bytes: int = 20 * 1024 * 1024):
    """Pallas TPU contrastive loss. output1/output2: (B, D); label: (B,)."""
    B, D = output1.shape
    label2d = label.astype(jnp.float32).reshape(B, 1)   # tiny; negligible bytes

    in_itemsize = jnp.dtype(output1.dtype).itemsize

    if tile_b is None:
        # Per grid step, ~2 inputs x 2 pipeline buffers of (TB, D) plus f32
        # temporaries; budget well under the 64 MiB of v7x (and v5e/v6e 128 MiB).
        rows = max(8, vmem_budget_bytes // (4 * D * max(in_itemsize, 4)))
        tile_b = int(min(B, (rows // 8) * 8, 1024))
        if tile_b <= 0 or tile_b >= B:
            tile_b = B                    # single block: always a legal block shape
    tile_b = int(tile_b)

    num_blocks = pl.cdiv(B, tile_b)
    mask_last = (B % tile_b) != 0

    kernel = functools.partial(
        _contrastive_loss_kernel,
        margin=float(margin), batch=B, tile_b=tile_b, mask_last=mask_last)

    cost = pl.CostEstimate(
        flops=4 * B * D + 8 * B,
        transcendentals=B,
        bytes_accessed=2 * B * D * in_itemsize + B * 4 + 4,
    )

    # NOTE: D < 128 (as in the demo) wastes vreg lanes; irrelevant once D is a
    # multiple of 128. Layout is kept as-is to preserve the module's semantics.
    out = pl.pallas_call(
        kernel,
        out_shape=jax.ShapeDtypeStruct((1, 1), jnp.float32),
        grid_spec=pltpu.PrefetchScalarGridSpec(
            num_scalar_prefetch=0,
            grid=(num_blocks,),
            in_specs=[
                pl.BlockSpec((tile_b, D), lambda i: (i, 0)),
                pl.BlockSpec((tile_b, D), lambda i: (i, 0)),
                pl.BlockSpec((tile_b, 1), lambda i: (i, 0)),
            ],
            out_specs=pl.BlockSpec((1, 1), lambda i: (0, 0)),
        ),
        compiler_params=pltpu.CompilerParams(
            # Output accumulates across the batch grid axis -> "arbitrary".
            # TODO(synk): for v7x dual-TC, emit lane-dense per-block partials
            # with a "parallel" axis and reduce in the wrapper.
            dimension_semantics=("arbitrary",),
            vmem_limit_bytes=48 * 1024 * 1024,
        ),
        cost_estimate=cost,
    )(output1, output2, label2d)
    return out[0, 0]


def _reference(output1, output2, label, margin=0.5):
    # Pure-JAX reference mirroring the PyTorch module.
    d = jnp.sqrt(jnp.sum((output1 - output2 + _EPS) ** 2, axis=-1))
    return jnp.mean((1.0 - label) * jnp.maximum(margin - d, 0.0) ** 2
                    + label * d ** 2)


if __name__ == "__main__":
    key = jax.random.PRNGKey(0)
    k1, k2, k3, k4, k5, k6 = jax.random.split(key, 6)

    # Case 1: small demo shape (single block along the batch).
    B, D = 8, 32
    o1 = jax.random.normal(k1, (B, D), dtype=jnp.float32)
    o2 = jax.random.normal(k2, (B, D), dtype=jnp.float32)
    lbl = jax.random.bernoulli(k3, 0.5, (B,)).astype(jnp.float32)

    loss = contrastive_loss(o1, o2, lbl, margin=0.5)
    jax.block_until_ready(loss)
    ref = _reference(o1, o2, lbl, margin=0.5)
    assert jnp.allclose(loss, ref, atol=1e-5, rtol=1e-5), (loss, ref)

    # Case 2: multi-block grid with a ragged last tile; bf16 inputs stay
    # narrow through HBM and are cast to f32 inside the kernel.
    B2, D2 = 100, 256
    p1 = jax.random.normal(k4, (B2, D2), dtype=jnp.bfloat16)
    p2 = jax.random.normal(k5, (B2, D2), dtype=jnp.bfloat16)
    lbl2 = jax.random.bernoulli(k6, 0.5, (B2,)).astype(jnp.float32)

    loss2 = contrastive_loss(p1, p2, lbl2, margin=0.5, tile_b=32)
    jax.block_until_ready(loss2)
    ref2 = _reference(p1.astype(jnp.float32), p2.astype(jnp.float32), lbl2,
                      margin=0.5)
    assert jnp.allclose(loss2, ref2, atol=1e-4, rtol=1e-4), (loss2, ref2)

    print("KERNEL_OK")
</pallas_src>

<mosaic_0001>
module attributes {stable_mosaic.version = 11 : i64} {
  func.func @_contrastive_loss_kernel(%arg0: i32, %arg1: memref<8x32xf32, #tpu.memory_space<vmem>>, %arg2: memref<8x32xf32, #tpu.memory_space<vmem>>, %arg3: memref<8x1xf32, #tpu.memory_space<vmem>>, %arg4: memref<1x1xf32, #tpu.memory_space<vmem>>) attributes {dimension_semantics = [#tpu.dimension_semantics<arbitrary>], iteration_bounds = array<i64: 1>, scalar_prefetch = 0 : i64, scratch_operands = 0 : i64, tpu.core_type = #tpu.core_type<tc>, window_params = [{transform_indices = @transform_0, window_bounds = array<i64: 8, 32>}, {transform_indices = @transform_1, window_bounds = array<i64: 8, 32>}, {transform_indices = @transform_2, window_bounds = array<i64: 8, 1>}, {pipeline_mode = #tpu.pipeline_mode<synchronous>, transform_indices = @transform_3, window_bounds = array<i64: 1, 1>}]} {
    %c0_i32 = arith.constant 0 : i32
    %0 = arith.cmpi eq, %arg0, %c0_i32 : i32
    %1 = arith.extui %0 : i1 to i32
    %c0_i32_0 = arith.constant 0 : i32
    %2 = arith.cmpi ne, %1, %c0_i32_0 : i32
    scf.if %2 {
      %cst_17 = arith.constant 0.000000e+00 : f32
      %34 = vector.broadcast %cst_17 : f32 to vector<1x1xf32>
      %c0_18 = arith.constant 0 : index
      %c0_19 = arith.constant 0 : index
      %35 = vector.load %arg4[%c0_18, %c0_19] : memref<1x1xf32, #tpu.memory_space<vmem>>, vector<1x1xf32>
      tpu.vector_store %arg4[%c0_18, %c0_19], %34 {strides = array<i32>} : memref<1x1xf32, #tpu.memory_space<vmem>>, vector<1x1xf32>,
    } else {
    }
    %c0 = arith.constant 0 : index
    %c0_1 = arith.constant 0 : index
    %3 = vector.load %arg1[%c0, %c0_1] : memref<8x32xf32, #tpu.memory_space<vmem>>, vector<8x32xf32>
    %c0_2 = arith.constant 0 : index
    %c0_3 = arith.constant 0 : index
    %4 = vector.load %arg2[%c0_2, %c0_3] : memref<8x32xf32, #tpu.memory_space<vmem>>, vector<8x32xf32>
    %c0_4 = arith.constant 0 : index
    %c0_5 = arith.constant 0 : index
    %5 = vector.load %arg3[%c0_4, %c0_5] : memref<8x1xf32, #tpu.memory_space<vmem>>, vector<8x1xf32>
    %6 = arith.subf %3, %4 : vector<8x32xf32>
    %cst = arith.constant 9.99999997E-7 : f32
    %7 = vector.broadcast %cst : f32 to vector<8x32xf32>
    %8 = arith.addf %6, %7 : vector<8x32xf32>
    %9 = arith.mulf %8, %8 : vector<8x32xf32>
    %cst_6 = arith.constant dense<0.000000e+00> : vector<8xf32>
    %10 = vector.multi_reduction <add>, %9, %cst_6 [1] : vector<8x32xf32> to vector<8xf32>
    %11 = vector.shape_cast %10 : vector<8xf32> to vector<8x1xf32>
    %12 = math.sqrt %11 : vector<8x1xf32>
    %cst_7 = arith.constant 5.000000e-01 : f32
    %13 = vector.broadcast %cst_7 : f32 to vector<8x1xf32>
    %14 = arith.subf %13, %12 : vector<8x1xf32>
    %cst_8 = arith.constant 0.000000e+00 : f32
    %15 = vector.broadcast %cst_8 : f32 to vector<8x1xf32>
    %16 = arith.maximumf %14, %15 : vector<8x1xf32>
    %cst_9 = arith.constant 1.000000e+00 : f32
    %17 = vector.broadcast %cst_9 : f32 to vector<8x1xf32>
    %18 = arith.subf %17, %5 : vector<8x1xf32>
    %19 = arith.mulf %16, %16 : vector<8x1xf32>
    %20 = arith.mulf %18, %19 : vector<8x1xf32>
    %21 = arith.mulf %5, %11 : vector<8x1xf32>
    %22 = arith.addf %20, %21 : vector<8x1xf32>
    %c0_10 = arith.constant 0 : index
    %c0_11 = arith.constant 0 : index
    %23 = vector.load %arg4[%c0_10, %c0_11] : memref<1x1xf32, #tpu.memory_space<vmem>>, vector<1x1xf32>
    %24 = vector.shape_cast %22 : vector<8x1xf32> to vector<1x8x1xf32>
    %cst_12 = arith.constant dense<0.000000e+00> : vector<1xf32>
    %25 = vector.multi_reduction <add>, %24, %cst_12 [1, 2] : vector<1x8x1xf32> to vector<1xf32>
    %26 = vector.shape_cast %25 : vector<1xf32> to vector<1x1x1xf32>
    %27 = vector.extract %26[0, 0, 0] : f32 from vector<1x1x1xf32>
    %28 = vector.broadcast %27 : f32 to vector<1x1xf32>
    %29 = arith.addf %23, %28 : vector<1x1xf32>
    %c0_13 = arith.constant 0 : index
    %c0_14 = arith.constant 0 : index
    %30 = vector.load %arg4[%c0_13, %c0_14] : memref<1x1xf32, #tpu.memory_space<vmem>>, vector<1x1xf32>
    tpu.vector_store %arg4[%c0_13, %c0_14], %29 {strides = array<i32>} : memref<1x1xf32, #tpu.memory_space<vmem>>, vector<1x1xf32>,
    %c0_i32_15 = arith.constant 0 : i32
    %31 = arith.cmpi eq, %arg0, %c0_i32_15 : i32
    %32 = arith.extui %31 : i1 to i32
    %c0_i32_16 = arith.constant 0 : i32
    %33 = arith.cmpi ne, %32, %c0_i32_16 : i32
    scf.if %33 {
      %c0_17 = arith.constant 0 : index
      %c0_18 = arith.constant 0 : index
      %34 = vector.load %arg4[%c0_17, %c0_18] : memref<1x1xf32, #tpu.memory_space<vmem>>, vector<1x1xf32>
      %cst_19 = arith.constant 1.250000e-01 : f32
      %35 = vector.broadcast %cst_19 : f32 to vector<1x1xf32>
      %36 = arith.mulf %34, %35 : vector<1x1xf32>
      %c0_20 = arith.constant 0 : index
      %c0_21 = arith.constant 0 : index
      %37 = vector.load %arg4[%c0_20, %c0_21] : memref<1x1xf32, #tpu.memory_space<vmem>>, vector<1x1xf32>
      tpu.vector_store %arg4[%c0_20, %c0_21], %36 {strides = array<i32>} : memref<1x1xf32, #tpu.memory_space<vmem>>, vector<1x1xf32>,
    } else {
    }
    return
  }
  func.func @transform_0(%arg0: i32) -> (i32, i32) {
    %c0_i32 = arith.constant 0 : i32
    %c0_i32_0 = arith.constant 0 : i32
    return %arg0, %c0_i32 : i32, i32
  }
  func.func @transform_1(%arg0: i32) -> (i32, i32) {
    %c0_i32 = arith.constant 0 : i32
    %c0_i32_0 = arith.constant 0 : i32
    return %arg0, %c0_i32 : i32, i32
  }
  func.func @transform_2(%arg0: i32) -> (i32, i32) {
    %c0_i32 = arith.constant 0 : i32
    %c0_i32_0 = arith.constant 0 : i32
    return %arg0, %c0_i32 : i32, i32
  }
  func.func @transform_3(%arg0: i32) -> (i32, i32) {
    %c0_i32 = arith.constant 0 : i32
    %c0_i32_0 = arith.constant 0 : i32
    %c0_i32_1 = arith.constant 0 : i32
    return %c0_i32, %c0_i32_0 : i32, i32
  }
}

</mosaic_0001>

<llo_original>
// kernel: tpu_custom_call.1
$region0: #{tpu_custom_call.1}
  #allocation0 [shape = 'u32[]', space=smem, size = 0x4, offset = 0x4, fixed_abs, tag = 'smem constant byte address 0x4 - core index']
  #allocation1 [shape = 'u32[144,128]{1,0:T(1,128)}', space=vmem, size = 0x12000, scoped, tag = 'internal scratch']
  %s0 = inlined_call_operand.vmem [shape: f32[8,32], index: 0, kind: input, shape index: {}]
  %s1 = inlined_call_operand.hbm [shape: f32[8,32], index: 1, kind: input, shape index: {}]
  %s2 = inlined_call_operand.vmem [shape: f32[8,1], index: 2, kind: input, shape index: {}]
  %s3 = inlined_call_operand.hbm [shape: f32[1,1], index: 3, kind: output, shape index: {}]
  %s4 = sld [smem:[#allocation0]]
  $region34: #{tpu_custom_call.1} parent=0
    _
  %s6 = ssub.s32 1, %s4
  %s7 = scalar_select 0, %s6, %s4
  $region1: #{tpu_custom_call.1} parent=0
    #allocation2 [shape = 'u8[4096]{0}', space=vmem, size = 0x1000, scoped, tag = 'input window, operand 1, single buffered']
    #allocation3 [shape = 's32[1]{0}', space=sflag, size = 0x4, scoped, tag = 'scoped memory for tpu_custom_call.1']
    #allocation4 [shape = 's32[1]{0}', space=sflag, size = 0x4, scoped, tag = 'scoped memory for tpu_custom_call.1']
    #allocation5 [shape = 'u8[512]{0}', space=vmem, size = 0x400, scoped, tag = 'output window, operand 0, single buffered']
    %8 = vsyncpa [#allocation3], 0
    %9 = vsyncpa [#allocation4], 0
    // Predicated region
    $region2: #{tpu_custom_call.1} parent=1 // pred_check
      _
    $region3: #{tpu_custom_call.1} parent=1 // pred_check_branch
      %11 = sbr.rel (0) target = $region5
    $region4: #{tpu_custom_call.1} parent=1 // pred_region
      _
    $region5: #{tpu_custom_call.1} parent=1 // pred_fallthru
      _
    // Predicated region
    $region6: #{tpu_custom_call.1} parent=1 // pred_check
      _
    $region7: #{tpu_custom_call.1} parent=1 // pred_check_branch
      %13 = sbr.rel (0) target = $region9
    $region8: #{tpu_custom_call.1} parent=1 // pred_region
      %s15 = ssub.s32 128, 128
      %16 = vsyncadd [#allocation3], %s15
      %s18 = sshll.u32 [#allocation2], 4
      %s19 = int_to_ptr.vmem [resolvable:$true] %s18
      %21 = dma.hbm_to_vmem [thread:$0]  %s1, 128, %s19, [#allocation3]
    $region9: #{tpu_custom_call.1} parent=1 // pred_fallthru
      _
    // Predicated region
    $region10: #{tpu_custom_call.1} parent=1 // pred_check
      _
    $region11: #{tpu_custom_call.1} parent=1 // pred_check_branch
      %23 = sbr.rel (0) target = $region13
    $region12: #{tpu_custom_call.1} parent=1 // pred_region
      _
    $region13: #{tpu_custom_call.1} parent=1 // pred_fallthru
      _
    // Predicated region
    $region14: #{tpu_custom_call.1} parent=1 // pred_check
      _
    $region15: #{tpu_custom_call.1} parent=1 // pred_check_branch
      %25 = sbr.rel (0) target = $region17
    $region16: #{tpu_custom_call.1} parent=1 // pred_region
      %26 = dma.done [#allocation3], 128
    $region17: #{tpu_custom_call.1} parent=1 // pred_fallthru
      _
    %p27 = scmp.eq.s32.totalorder 0, 0
    // Predicated region
    $region18: #{tpu_custom_call.1} parent=1 // pred_check
      %p28 = pneg %p27
    $region19: #{tpu_custom_call.1} parent=1 // pred_check_branch
      %30 = sbr.rel (%p28) target = $region21
    $region20: #{tpu_custom_call.1} parent=1 // pred_region
      %vm31 = vcmask 0
      %32 = vst.msk [vmem:[#allocation5] sm:$0x1] %vm31, 0.0
    $region21: #{tpu_custom_call.1} parent=1 // pred_fallthru
      _
    %v33 = vld [vmem:[%s0] sm:$0xff]
    %v34 = vld [vmem:[#allocation2] sm:$0xff]
    %v35 = vld [vmem:[%s2] sm:$0xff]
    %v36 = vsub.f32 %v33, %v34
    %v37 = vadd.f32 %v36, 1e-06
    %v38 = vmul.f32 %v37, %v37
    %vm39 = vcmask 261120
    %v40 = vsel %vm39, %v38, 0.0
    %41 = vadd.xlane.f32.xlu0 %v40
    %v42 = vpop.xlane.xlu0 %41
    %v43 = vrsqrt.pop %v42
    %v44 = vmul.f32 %v42, %v43
    %vm45 = vcmp.eq.f32.partialorder %v42, inf
    %v46 = vsel %vm45, %v42, %v44
    %vm47 = vcmp.eq.f32.partialorder %v42, 0.0
    %v48 = vand.u32 %v42, 2147483648
    %v49 = vsel %vm47, %v48, %v46
    %v50 = vsub.f32 0.5, %v49
    %v51 = vmax.f32 %v50, 0.0
    %v52 = vsub.f32 1.0, %v35
    %v53 = vmul.f32 %v51, %v51
    %v54 = vmul.f32 %v52, %v53
    %v55 = vmul.f32 %v35, %v42
    %v56 = vadd.f32 %v54, %v55
    %v57 = vld [vmem:[#allocation5] sm:$0x1]
    %vm58 = vcmask 7168
    %v59 = vsel %vm58, %v56, 0.0
    %60 = vadd.xlane.f32.xlu0 %v59
    %v61 = vpop.xlane.xlu0 %60
    %v62 = vrot.slane %v61, 4
    %v63 = vadd.f32 %v61, %v62
    %v64 = vrot.slane %v63, 2
    %v65 = vadd.f32 %v63, %v64
    %v66 = vrot.slane %v65, 1
    %v67 = vadd.f32 %v65, %v66
    %s68 = vtos %v67
    %v69 = vstv %s68
    %v70 = vadd.f32 %v57, %v69
    %vm71 = vcmask 0
    %72 = vst.msk [vmem:[#allocation5] sm:$0x1] %vm71, %v70
    // Predicated region
    $region22: #{tpu_custom_call.1} parent=1 // pred_check
      %p73 = pneg %p27
    $region23: #{tpu_custom_call.1} parent=1 // pred_check_branch
      %75 = sbr.rel (%p73) target = $region25
    $region24: #{tpu_custom_call.1} parent=1 // pred_region
      %v76 = vld [vmem:[#allocation5] sm:$0x1]
      %v77 = vmul.f32 %v76, 0.125
      %78 = vst.msk [vmem:[#allocation5] sm:$0x1] %vm71, %v77
    $region25: #{tpu_custom_call.1} parent=1 // pred_fallthru
      _
    // Predicated region
    $region26: #{tpu_custom_call.1} parent=1 // pred_check
      _
    $region27: #{tpu_custom_call.1} parent=1 // pred_check_branch
      %80 = sbr.rel (0) target = $region29
    $region28: #{tpu_custom_call.1} parent=1 // pred_region
      %s82 = ssub.s32 16, 16
      %83 = vsyncadd [#allocation4], %s82
      %s85 = sshll.u32 [#allocation5], 4
      %s86 = int_to_ptr.vmem [resolvable:$true] %s85
      %88 = dma.vmem_to_hbm [thread:$0]  %s86, 16, %s3, [#allocation4]
    $region29: #{tpu_custom_call.1} parent=1 // pred_fallthru
      _
    // Predicated region
    $region30: #{tpu_custom_call.1} parent=1 // pred_check
      _
    $region31: #{tpu_custom_call.1} parent=1 // pred_check_branch
      %90 = sbr.rel (0) target = $region33
    $region32: #{tpu_custom_call.1} parent=1 // pred_region
      %91 = dma.done [#allocation4], 16
    $region33: #{tpu_custom_call.1} parent=1 // pred_fallthru
      _
    %92 = vsyncpa [#allocation3], 1
    %93 = vsyncpa [#allocation4], 1

</llo_original>
